<compile_context>
chip_gen: v5e
topology: v5e:2x2
jax: 0.10.0
libtpu: 0.0.40
codegen_flags: <defaults>
</compile_context>

<pallas_src>
import functools

import jax
import jax.numpy as jnp
from jax.experimental import pallas as pl
from jax.experimental.pallas import tpu as pltpu

EPS = 1e-5                     # nn.BatchNorm2d default
LANE = 128                     # pad K and channel dims to multiples of this
VMEM_LIMIT = 32 * 1024 * 1024  # explicit scoped-VMEM budget (safe on v5e/v6e/v7x)


def _round_up(x, m):
    return (x + m - 1) // m * m


def _pad2d(a, rows, cols):
    return jnp.pad(a, ((0, rows - a.shape[0]), (0, cols - a.shape[1])))


def _choose_tm(m):
    """M-tile: large enough to pipeline well, small enough for v7x's 64 MiB VMEM."""
    if m >= 512:
        return 512
    return _round_up(max(m, 8), 8)


def _choose_tk(kp):
    for t in (512, 256, 128):
        if kp % t == 0:
            return t
    return kp


# ---------------------------------------------------------------------------
# Pass 1: tiled MXU matmul (the conv) + per-M-tile channel sum / sum-of-squares
# ---------------------------------------------------------------------------
def _conv_stats_kernel(p_ref, w_ref, y_ref, s_ref, ss_ref, acc_ref):
    k = pl.program_id(1)

    @pl.when(k == 0)
    def _():
        acc_ref[...] = jnp.zeros_like(acc_ref)

    acc_ref[...] += jnp.dot(p_ref[...], w_ref[...],
                            preferred_element_type=jnp.float32)

    @pl.when(k == pl.num_programs(1) - 1)
    def _():
        y = acc_ref[...]
        y_ref[...] = y
        s_ref[...] = jnp.sum(y, axis=0, keepdims=True).reshape(1, 1, -1)
        ss_ref[...] = jnp.sum(y * y, axis=0, keepdims=True).reshape(1, 1, -1)


def conv_matmul_stats(patches, w, *, tm):
    """patches: [Mp, Kp], w: [Kp, Pp]  (Mp % tm == 0, Kp/Pp multiples of 128).

    Returns y [Mp, Pp] f32 and per-M-tile channel sum / sumsq [num_m, 1, Pp] f32.
    """
    mp, kp = patches.shape
    pp = w.shape[1]
    tk = _choose_tk(kp)
    num_m, num_k = mp // tm, kp // tk

    return pl.pallas_call(
        _conv_stats_kernel,
        out_shape=(jax.ShapeDtypeStruct((mp, pp), jnp.float32),
                   jax.ShapeDtypeStruct((num_m, 1, pp), jnp.float32),
                   jax.ShapeDtypeStruct((num_m, 1, pp), jnp.float32)),
        grid_spec=pltpu.PrefetchScalarGridSpec(
            num_scalar_prefetch=0,
            grid=(num_m, num_k),
            in_specs=[pl.BlockSpec((tm, tk), lambda i, k: (i, k)),
                      pl.BlockSpec((tk, pp), lambda i, k: (k, 0))],
            out_specs=[pl.BlockSpec((tm, pp), lambda i, k: (i, 0)),
                       pl.BlockSpec((1, 1, pp), lambda i, k: (i, 0, 0)),
                       pl.BlockSpec((1, 1, pp), lambda i, k: (i, 0, 0))],
            scratch_shapes=[pltpu.VMEM((tm, pp), jnp.float32)]),
        compiler_params=pltpu.CompilerParams(
            dimension_semantics=("parallel", "arbitrary"),
            vmem_limit_bytes=VMEM_LIMIT),
    )(patches, w)


# ---------------------------------------------------------------------------
# Pass 2: BN affine (scale/shift) [+ fused residual-BN] [+ ReLU], tiled over M
# ---------------------------------------------------------------------------
def _norm_kernel(y_ref, sc_ref, sh_ref, o_ref, *, relu):
    out = y_ref[...] * sc_ref[...] + sh_ref[...]
    if relu:
        out = jnp.maximum(out, 0.0)
    o_ref[...] = out


def _norm_res_kernel(y_ref, sc_ref, sh_ref, r_ref, rsc_ref, rsh_ref, o_ref, *, relu):
    out = (y_ref[...] * sc_ref[...] + sh_ref[...]
           + r_ref[...] * rsc_ref[...] + rsh_ref[...])
    if relu:
        out = jnp.maximum(out, 0.0)
    o_ref[...] = out


def normalize_affine(y, scale, shift, *, residual=None, rscale=None, rshift=None,
                     relu=False, tm):
    mp, pp = y.shape
    num_m = mp // tm
    row = pl.BlockSpec((tm, pp), lambda i: (i, 0))
    vec = pl.BlockSpec((1, pp), lambda i: (0, 0))

    if residual is None:
        kern = functools.partial(_norm_kernel, relu=relu)
        in_specs, args = [row, vec, vec], (y, scale, shift)
    else:
        kern = functools.partial(_norm_res_kernel, relu=relu)
        in_specs = [row, vec, vec, row, vec, vec]
        args = (y, scale, shift, residual, rscale, rshift)

    return pl.pallas_call(
        kern,
        out_shape=jax.ShapeDtypeStruct((mp, pp), jnp.float32),
        grid_spec=pltpu.PrefetchScalarGridSpec(
            num_scalar_prefetch=0,
            grid=(num_m,),
            in_specs=in_specs,
            out_specs=pl.BlockSpec((tm, pp), lambda i: (i, 0))),
        compiler_params=pltpu.CompilerParams(
            dimension_semantics=("parallel",),
            vmem_limit_bytes=VMEM_LIMIT),
    )(*args)


# ---------------------------------------------------------------------------
# Glue: stats -> scale/shift, im2col, one-time parameter prep, block forward
# ---------------------------------------------------------------------------
def _stats_to_scale_shift(s, ss, m_true, gamma_p, beta_p):
    """Combine per-tile sums into training-mode BN scale/shift (biased variance)."""
    total = jnp.sum(s, axis=0)          # (1, Pp)
    total_sq = jnp.sum(ss, axis=0)      # (1, Pp)
    mean = total / m_true
    var = total_sq / m_true - mean * mean
    scale = gamma_p * jax.lax.rsqrt(var + EPS)
    shift = beta_p - mean * scale
    return scale, shift


def im2col(x_nhwc, k, stride, padding):
    # TODO(synk): wrapper-side patch extraction; fusing it as a tap-grid axis in the
    # conv kernel would cut the remaining 3x3-conv HBM traffic further.
    n, h, w, c = x_nhwc.shape
    xp = jnp.pad(x_nhwc, ((0, 0), (padding, padding), (padding, padding), (0, 0)))
    ho = (h + 2 * padding - k) // stride + 1
    wo = (w + 2 * padding - k) // stride + 1
    cols = []
    for dh in range(k):
        for dw in range(k):
            cols.append(xp[:, dh:dh + stride * ho:stride, dw:dw + stride * wo:stride, :])
    patches = jnp.concatenate(cols, axis=-1)                 # [N, Ho, Wo, k*k*C]
    return patches.reshape(n * ho * wo, k * k * c), (n, ho, wo)


def prepare_block_params(params, in_planes, planes):
    """One-time prep: weights -> [K, P] matmul layout, zero-padded to lane-dense
    (128-multiple) K and P; gamma/beta padded likewise (pad channels get scale 0)."""
    pp = _round_up(planes, LANE)

    def wmat(w_oihw):
        kk = w_oihw.shape[1] * w_oihw.shape[2] * w_oihw.shape[3]
        wm = jnp.transpose(w_oihw, (2, 3, 1, 0)).reshape(kk, -1)   # (dh,dw,ci) x P
        return _pad2d(wm.astype(jnp.float32), _round_up(kk, LANE), pp)

    def cvec(v):
        return _pad2d(v.reshape(1, -1).astype(jnp.float32), 1, pp)

    prep = {
        "Pp": pp,
        "w1": wmat(params["w1"]), "g1": cvec(params["g1"]), "b1": cvec(params["b1"]),
        "w2": wmat(params["w2"]), "g2": cvec(params["g2"]), "b2": cvec(params["b2"]),
        "id_scale": _pad2d(jnp.ones((1, planes), jnp.float32), 1, pp),
        "id_shift": jnp.zeros((1, pp), jnp.float32),
    }
    if "ws" in params:
        prep["ws"] = wmat(params["ws"])
        prep["gs"] = cvec(params["gs"])
        prep["bs"] = cvec(params["bs"])
    return prep


def r_basic_block_forward(x_nchw, prep, stride, in_planes, planes, use_bf16=True):
    """relu(bn2(conv2(relu(bn1(conv1(x))))) + shortcut(x)), NCHW in / NCHW out."""
    mm_dtype = jnp.bfloat16 if use_bf16 else jnp.float32
    pp = prep["Pp"]

    x = jnp.transpose(x_nchw, (0, 2, 3, 1)).astype(jnp.float32)   # NHWC

    # ---- conv1 (sparse 3x3, stride) + bn1 + relu -------------------------------
    p1, (n, ho, wo) = im2col(x, 3, stride, 1)
    m = n * ho * wo
    tm = _choose_tm(m)
    mp = _round_up(m, tm)

    w1 = prep["w1"].astype(mm_dtype)
    p1p = _pad2d(p1, mp, w1.shape[0]).astype(mm_dtype)
    y1, s1, ss1 = conv_matmul_stats(p1p, w1, tm=tm)
    scale1, shift1 = _stats_to_scale_shift(s1, ss1, m, prep["g1"], prep["b1"])
    out1 = normalize_affine(y1, scale1, shift1, relu=True, tm=tm)   # [Mp, Pp] f32

    # ---- conv2 (sparse 3x3, stride 1) + bn2 ------------------------------------
    out1_nhwc = out1[:m, :planes].reshape(n, ho, wo, planes)
    p2, _ = im2col(out1_nhwc, 3, 1, 1)
    w2 = prep["w2"].astype(mm_dtype)
    p2p = _pad2d(p2, mp, w2.shape[0]).astype(mm_dtype)
    y2, s2, ss2 = conv_matmul_stats(p2p, w2, tm=tm)
    scale2, shift2 = _stats_to_scale_shift(s2, ss2, m, prep["g2"], prep["b2"])

    # ---- shortcut --------------------------------------------------------------
    if stride != 1 or in_planes != planes:
        # downsample: 1x1 strided conv; its BN affine is fused into the final
        # normalize kernel (no extra [M,P] shortcut round-trip through HBM).
        xs = x[:, ::stride, ::stride, :].reshape(m, in_planes)
        ws = prep["ws"].astype(mm_dtype)
        xsp = _pad2d(xs, mp, ws.shape[0]).astype(mm_dtype)
        ys, s_s, ss_s = conv_matmul_stats(xsp, ws, tm=tm)
        rscale, rshift = _stats_to_scale_shift(s_s, ss_s, m, prep["gs"], prep["bs"])
        resid = ys
    else:
        resid = _pad2d(x.reshape(m, in_planes), mp, pp)
        rscale, rshift = prep["id_scale"], prep["id_shift"]

    # ---- bn2-affine + shortcut-BN + residual add + final relu (all fused) ------
    out = normalize_affine(y2, scale2, shift2, residual=resid, rscale=rscale,
                           rshift=rshift, relu=True, tm=tm)

    out = out[:m, :planes].reshape(n, ho, wo, planes)
    return jnp.transpose(out, (0, 3, 1, 2))                        # NCHW


# ---------------------------------------------------------------------------
# Pure-JAX reference (same math) for a sanity check
# ---------------------------------------------------------------------------
def _reference(x, params, stride, in_planes, planes):
    def conv(x_, w_, s, pad):
        return jax.lax.conv_general_dilated(
            x_, w_, (s, s), ((pad, pad), (pad, pad)),
            dimension_numbers=("NCHW", "OIHW", "NCHW"),
            precision=jax.lax.Precision.HIGHEST)

    def bn(y, g, b):
        mean = y.mean(axis=(0, 2, 3), keepdims=True)
        var = ((y - mean) ** 2).mean(axis=(0, 2, 3), keepdims=True)
        return (g.reshape(1, -1, 1, 1) * (y - mean) * jax.lax.rsqrt(var + EPS)
                + b.reshape(1, -1, 1, 1))

    out = jax.nn.relu(bn(conv(x, params["w1"], stride, 1), params["g1"], params["b1"]))
    out = bn(conv(out, params["w2"], 1, 1), params["g2"], params["b2"])
    if stride != 1 or in_planes != planes:
        sc = bn(conv(x, params["ws"], stride, 0), params["gs"], params["bs"])
    else:
        sc = x
    return jax.nn.relu(out + sc)


# ---------------------------------------------------------------------------
if __name__ == "__main__":
    key = jax.random.PRNGKey(0)
    ks = jax.random.split(key, 24)

    def sparse_weight(kw, km, shape):
        dense = 0.1 * jax.random.normal(kw, shape, dtype=jnp.float32)
        mask = jax.random.bernoulli(km, 0.5, shape).astype(jnp.float32)
        return dense * mask

    def bn_params(kg, kb, c):
        return (jax.random.uniform(kg, (1, c), jnp.float32, 0.5, 1.5),
                0.1 * jax.random.normal(kb, (1, c), jnp.float32))

    # ---- case 1: downsample block (stride=2, channel expansion) ----------------
    in_planes, planes, stride = 4, 8, 2
    N, H, W = 2, 16, 16
    g1, b1 = bn_params(ks[2], ks[3], planes)
    g2, b2 = bn_params(ks[6], ks[7], planes)
    gs, bs = bn_params(ks[9], ks[10], planes)
    params = {
        "w1": sparse_weight(ks[0], ks[1], (planes, in_planes, 3, 3)),
        "g1": g1, "b1": b1,
        "w2": sparse_weight(ks[4], ks[5], (planes, planes, 3, 3)),
        "g2": g2, "b2": b2,
        "ws": 0.1 * jax.random.normal(ks[8], (planes, in_planes, 1, 1), jnp.float32),
        "gs": gs, "bs": bs,
    }
    x = jax.random.normal(ks[11], (N, in_planes, H, W), dtype=jnp.float32)

    prep = prepare_block_params(params, in_planes, planes)
    ref = _reference(x, params, stride, in_planes, planes)

    out_f32 = jax.block_until_ready(
        r_basic_block_forward(x, prep, stride, in_planes, planes, use_bf16=False))
    assert out_f32.shape == ref.shape == (N, planes, H // stride, W // stride)
    assert jnp.allclose(out_f32, ref, rtol=1e-2, atol=1e-2), "f32 path mismatch (downsample)"

    out_bf16 = jax.block_until_ready(
        r_basic_block_forward(x, prep, stride, in_planes, planes, use_bf16=True))
    assert jnp.allclose(out_bf16, ref, rtol=5e-2, atol=5e-2), "bf16 path mismatch (downsample)"

    # ---- case 2: identity-shortcut block (stride=1, in_planes == planes) -------
    in2 = pl2 = 8
    g1b, b1b = bn_params(ks[14], ks[15], pl2)
    g2b, b2b = bn_params(ks[18], ks[19], pl2)
    params2 = {
        "w1": sparse_weight(ks[12], ks[13], (pl2, in2, 3, 3)),
        "g1": g1b, "b1": b1b,
        "w2": sparse_weight(ks[16], ks[17], (pl2, pl2, 3, 3)),
        "g2": g2b, "b2": b2b,
    }
    x2 = jax.random.normal(ks[20], (2, in2, 8, 8), dtype=jnp.float32)

    prep2 = prepare_block_params(params2, in2, pl2)
    ref2 = _reference(x2, params2, 1, in2, pl2)
    out2 = jax.block_until_ready(
        r_basic_block_forward(x2, prep2, 1, in2, pl2, use_bf16=True))
    assert out2.shape == ref2.shape == (2, pl2, 8, 8)
    assert jnp.allclose(out2, ref2, rtol=5e-2, atol=5e-2), "bf16 path mismatch (identity)"

    print("KERNEL_OK")
</pallas_src>

<mosaic_0001>
module attributes {stable_mosaic.version = 11 : i64} {
  func.func @_conv_stats_kernel(%arg0: i32, %arg1: i32, %arg2: memref<128x128xf32, #tpu.memory_space<vmem>>, %arg3: memref<128x128xf32, #tpu.memory_space<vmem>>, %arg4: memref<128x128xf32, #tpu.memory_space<vmem>>, %arg5: memref<1x1x128xf32, #tpu.memory_space<vmem>>, %arg6: memref<1x1x128xf32, #tpu.memory_space<vmem>>, %arg7: memref<128x128xf32, #tpu.memory_space<vmem>>) attributes {dimension_semantics = [#tpu.dimension_semantics<parallel>, #tpu.dimension_semantics<arbitrary>], iteration_bounds = array<i64: 1, 1>, scalar_prefetch = 0 : i64, scratch_operands = 1 : i64, tpu.core_type = #tpu.core_type<tc>, window_params = [{transform_indices = @transform_0, window_bounds = array<i64: 128, 128>}, {transform_indices = @transform_1, window_bounds = array<i64: 128, 128>}, {transform_indices = @transform_2, window_bounds = array<i64: 128, 128>}, {transform_indices = @transform_3, window_bounds = array<i64: 1, 1, 128>}, {transform_indices = @transform_4, window_bounds = array<i64: 1, 1, 128>}]} {
    %c0_i32 = arith.constant 0 : i32
    %0 = arith.cmpi eq, %arg1, %c0_i32 : i32
    %1 = arith.extui %0 : i1 to i32
    %c0_i32_0 = arith.constant 0 : i32
    %2 = arith.cmpi ne, %1, %c0_i32_0 : i32
    scf.if %2 {
      %cst_10 = arith.constant 0.000000e+00 : f32
      %12 = vector.broadcast %cst_10 : f32 to vector<128x128xf32>
      %c0_11 = arith.constant 0 : index
      %c0_12 = arith.constant 0 : index
      %13 = vector.load %arg7[%c0_11, %c0_12] : memref<128x128xf32, #tpu.memory_space<vmem>>, vector<128x128xf32>
      tpu.vector_store %arg7[%c0_11, %c0_12], %12 {strides = array<i32>} : memref<128x128xf32, #tpu.memory_space<vmem>>, vector<128x128xf32>,
    } else {
    }
    %c0 = arith.constant 0 : index
    %c0_1 = arith.constant 0 : index
    %3 = vector.load %arg7[%c0, %c0_1] : memref<128x128xf32, #tpu.memory_space<vmem>>, vector<128x128xf32>
    %c0_2 = arith.constant 0 : index
    %c0_3 = arith.constant 0 : index
    %4 = vector.load %arg2[%c0_2, %c0_3] : memref<128x128xf32, #tpu.memory_space<vmem>>, vector<128x128xf32>
    %c0_4 = arith.constant 0 : index
    %c0_5 = arith.constant 0 : index
    %5 = vector.load %arg3[%c0_4, %c0_5] : memref<128x128xf32, #tpu.memory_space<vmem>>, vector<128x128xf32>
    %cst = arith.constant dense<0.000000e+00> : vector<128x128xf32>
    %6 = tpu.matmul %4, %5, %cst {dimension_numbers = #tpu.dot_dimension_numbers<[1], [0], [0], [1], [0, 0, 1, 1], [], []>} : vector<128x128xf32>, vector<128x128xf32>, vector<128x128xf32> -> vector<128x128xf32>
    %7 = arith.addf %3, %6 : vector<128x128xf32>
    %c0_6 = arith.constant 0 : index
    %c0_7 = arith.constant 0 : index
    %8 = vector.load %arg7[%c0_6, %c0_7] : memref<128x128xf32, #tpu.memory_space<vmem>>, vector<128x128xf32>
    tpu.vector_store %arg7[%c0_6, %c0_7], %7 {strides = array<i32>} : memref<128x128xf32, #tpu.memory_space<vmem>>, vector<128x128xf32>,
    %c0_i32_8 = arith.constant 0 : i32
    %9 = arith.cmpi eq, %arg1, %c0_i32_8 : i32
    %10 = arith.extui %9 : i1 to i32
    %c0_i32_9 = arith.constant 0 : i32
    %11 = arith.cmpi ne, %10, %c0_i32_9 : i32
    scf.if %11 {
      %c0_10 = arith.constant 0 : index
      %c0_11 = arith.constant 0 : index
      %12 = vector.load %arg7[%c0_10, %c0_11] : memref<128x128xf32, #tpu.memory_space<vmem>>, vector<128x128xf32>
      %c0_12 = arith.constant 0 : index
      %c0_13 = arith.constant 0 : index
      %13 = vector.load %arg4[%c0_12, %c0_13] : memref<128x128xf32, #tpu.memory_space<vmem>>, vector<128x128xf32>
      tpu.vector_store %arg4[%c0_12, %c0_13], %12 {strides = array<i32>} : memref<128x128xf32, #tpu.memory_space<vmem>>, vector<128x128xf32>,
      %cst_14 = arith.constant dense<0.000000e+00> : vector<128xf32>
      %14 = vector.multi_reduction <add>, %12, %cst_14 [0] : vector<128x128xf32> to vector<128xf32>
      %15 = vector.shape_cast %14 : vector<128xf32> to vector<1x128xf32>
      %16 = vector.shape_cast %15 : vector<1x128xf32> to vector<1x1x128xf32>
      %c0_15 = arith.constant 0 : index
      %c0_16 = arith.constant 0 : index
      %c0_17 = arith.constant 0 : index
      %17 = vector.load %arg5[%c0_15, %c0_16, %c0_17] : memref<1x1x128xf32, #tpu.memory_space<vmem>>, vector<1x1x128xf32>
      tpu.vector_store %arg5[%c0_15, %c0_16, %c0_17], %16 {strides = array<i32>} : memref<1x1x128xf32, #tpu.memory_space<vmem>>, vector<1x1x128xf32>,
      %18 = arith.mulf %12, %12 : vector<128x128xf32>
      %cst_18 = arith.constant dense<0.000000e+00> : vector<128xf32>
      %19 = vector.multi_reduction <add>, %18, %cst_18 [0] : vector<128x128xf32> to vector<128xf32>
      %20 = vector.shape_cast %19 : vector<128xf32> to vector<1x128xf32>
      %21 = vector.shape_cast %20 : vector<1x128xf32> to vector<1x1x128xf32>
      %c0_19 = arith.constant 0 : index
      %c0_20 = arith.constant 0 : index
      %c0_21 = arith.constant 0 : index
      %22 = vector.load %arg6[%c0_19, %c0_20, %c0_21] : memref<1x1x128xf32, #tpu.memory_space<vmem>>, vector<1x1x128xf32>
      tpu.vector_store %arg6[%c0_19, %c0_20, %c0_21], %21 {strides = array<i32>} : memref<1x1x128xf32, #tpu.memory_space<vmem>>, vector<1x1x128xf32>,
    } else {
    }
    return
  }
  func.func @transform_0(%arg0: i32, %arg1: i32) -> (i32, i32) {
    %c0_i32 = arith.constant 0 : i32
    return %arg0, %arg1 : i32, i32
  }
  func.func @transform_1(%arg0: i32, %arg1: i32) -> (i32, i32) {
    %c0_i32 = arith.constant 0 : i32
    %c0_i32_0 = arith.constant 0 : i32
    return %arg1, %c0_i32 : i32, i32
  }
  func.func @transform_2(%arg0: i32, %arg1: i32) -> (i32, i32) {
    %c0_i32 = arith.constant 0 : i32
    %c0_i32_0 = arith.constant 0 : i32
    return %arg0, %c0_i32 : i32, i32
  }
  func.func @transform_3(%arg0: i32, %arg1: i32) -> (i32, i32, i32) {
    %c0_i32 = arith.constant 0 : i32
    %c0_i32_0 = arith.constant 0 : i32
    %c0_i32_1 = arith.constant 0 : i32
    return %arg0, %c0_i32, %c0_i32_0 : i32, i32, i32
  }
  func.func @transform_4(%arg0: i32, %arg1: i32) -> (i32, i32, i32) {
    %c0_i32 = arith.constant 0 : i32
    %c0_i32_0 = arith.constant 0 : i32
    %c0_i32_1 = arith.constant 0 : i32
    return %arg0, %c0_i32, %c0_i32_0 : i32, i32, i32
  }
}

</mosaic_0001>

<llo_original>
// kernel: tpu_custom_call.1
$region0: #{tpu_custom_call.1}
  #allocation0 [shape = 'u32[]', space=smem, size = 0x4, offset = 0x4, fixed_abs, tag = 'smem constant byte address 0x4 - core index']
  #allocation1 [shape = 'u32[72,128]{1,0:T(1,128)}', space=vmem, size = 0x9000, scoped, tag = 'internal scratch']
  #allocation2 [shape = 'f32[128,128]{1,0:T(8,128)}', space=vmem, size = 0x10000, scoped, tag = 'scratch operand']
  %s0 = inlined_call_operand.hbm [shape: f32[128,128], index: 0, kind: input, shape index: {}]
  %s1 = inlined_call_operand.hbm [shape: f32[128,128], index: 1, kind: input, shape index: {}]
  %s2 = inlined_call_operand.hbm [shape: f32[128,128], index: 2, kind: output, shape index: {0}]
  %s3 = inlined_call_operand.hbm [shape: f32[1,1,128], index: 3, kind: output, shape index: {1}]
  %s4 = inlined_call_operand.hbm [shape: f32[1,1,128], index: 4, kind: output, shape index: {2}]
  %5 = xla_tuple %s2, %s3, %s4
  %s6 = sld [smem:[#allocation0]]
  $region50: #{tpu_custom_call.1} parent=0
    _
  %s8 = ssub.s32 1, %s6
  %s9 = scalar_select 0, %s8, %s6
  $region1: #{tpu_custom_call.1} parent=0
    #allocation3 [shape = 'u8[65536]{0}', space=vmem, size = 0x10000, scoped, tag = 'input window, operand 0, single buffered']
    #allocation4 [shape = 's32[1]{0}', space=sflag, size = 0x4, scoped, tag = 'scoped memory for tpu_custom_call.1']
    #allocation5 [shape = 's32[1]{0}', space=sflag, size = 0x4, scoped, tag = 'scoped memory for tpu_custom_call.1']
    #allocation6 [shape = 'u8[65536]{0}', space=vmem, size = 0x10000, scoped, tag = 'input window, operand 1, single buffered']
    #allocation7 [shape = 's32[1]{0}', space=sflag, size = 0x4, scoped, tag = 'scoped memory for tpu_custom_call.1']
    #allocation8 [shape = 'u8[65536]{0}', space=vmem, size = 0x10000, scoped, tag = 'output window, operand 0, single buffered']
    #allocation9 [shape = 'u8[512]{0}', space=vmem, size = 0x400, scoped, tag = 'output window, operand 1, single buffered']
    #allocation10 [shape = 's32[1]{0}', space=sflag, size = 0x4, scoped, tag = 'scoped memory for tpu_custom_call.1']
    #allocation11 [shape = 'u8[512]{0}', space=vmem, size = 0x400, scoped, tag = 'output window, operand 2, single buffered']
    %10 = vsyncpa [#allocation4], 0
    %11 = vsyncpa [#allocation7], 0
    %12 = vsyncpa [#allocation5], 0
    %13 = vsyncpa [#allocation10], 0
    // Predicated region
    $region2: #{tpu_custom_call.1} parent=1 // pred_check
      _
    $region3: #{tpu_custom_call.1} parent=1 // pred_check_branch
      %15 = sbr.rel (0) target = $region5
    $region4: #{tpu_custom_call.1} parent=1 // pred_region
      %17 = vsyncadd [#allocation4], 0
      %s18 = sshll.u32 %s0, 4
      %s19 = int_to_ptr.hbm [resolvable:$true] %s18
      %s20 = sshll.u32 [#allocation3], 4
      %s21 = int_to_ptr.vmem [resolvable:$true] %s20
      %26 = dma.hbm_to_vmem [thread:$0]  %s19, 2048, %s21, [#allocation4], 128, 128, 8
    $region5: #{tpu_custom_call.1} parent=1 // pred_fallthru
      _
    // Predicated region
    $region6: #{tpu_custom_call.1} parent=1 // pred_check
      _
    $region7: #{tpu_custom_call.1} parent=1 // pred_check_branch
      %28 = sbr.rel (0) target = $region9
    $region8: #{tpu_custom_call.1} parent=1 // pred_region
      %30 = vsyncadd [#allocation7], 0
      %s31 = sshll.u32 %s1, 4
      %s32 = int_to_ptr.hbm [resolvable:$true] %s31
      %s33 = sshll.u32 [#allocation6], 4
      %s34 = int_to_ptr.vmem [resolvable:$true] %s33
      %39 = dma.hbm_to_vmem [thread:$0]  %s32, 2048, %s34, [#allocation7], 128, 128, 8
    $region9: #{tpu_custom_call.1} parent=1 // pred_fallthru
      _
    // Predicated region
    $region10: #{tpu_custom_call.1} parent=1 // pred_check
      _
    $region11: #{tpu_custom_call.1} parent=1 // pred_check_branch
      %41 = sbr.rel (0) target = $region13
    $region12: #{tpu_custom_call.1} parent=1 // pred_region
      %43 = dma.done [#allocation4], 2048
    $region13: #{tpu_custom_call.1} parent=1 // pred_fallthru
      _
    // Predicated region
    $region14: #{tpu_custom_call.1} parent=1 // pred_check
      _
    $region15: #{tpu_custom_call.1} parent=1 // pred_check_branch
      %45 = sbr.rel (0) target = $region17
    $region16: #{tpu_custom_call.1} parent=1 // pred_region
      %47 = dma.done [#allocation7], 2048
    $region17: #{tpu_custom_call.1} parent=1 // pred_fallthru
      _
    %p48 = scmp.eq.s32.totalorder 0, 0
    // Predicated region
    $region18: #{tpu_custom_call.1} parent=1 // pred_check
      %p49 = pneg %p48
    $region19: #{tpu_custom_call.1} parent=1 // pred_check_branch
      %51 = sbr.rel (%p49) target = $region21
    $region20: #{tpu_custom_call.1} parent=1 // pred_region
      %52 = vst [vmem:[#allocation2] sm:$0xff] 0.0
      %53 = vst [vmem:[#allocation2 + $0x8] sm:$0xff] 0.0
      %54 = vst [vmem:[#allocation2 + $0x10] sm:$0xff] 0.0
      %55 = vst [vmem:[#allocation2 + $0x18] sm:$0xff] 0.0
      %56 = vst [vmem:[#allocation2 + $0x20] sm:$0xff] 0.0
      %57 = vst [vmem:[#allocation2 + $0x28] sm:$0xff] 0.0
      %58 = vst [vmem:[#allocation2 + $0x30] sm:$0xff] 0.0
      %59 = vst [vmem:[#allocation2 + $0x38] sm:$0xff] 0.0
      %60 = vst [vmem:[#allocation2 + $0x40] sm:$0xff] 0.0
      %61 = vst [vmem:[#allocation2 + $0x48] sm:$0xff] 0.0
      %62 = vst [vmem:[#allocation2 + $0x50] sm:$0xff] 0.0
      %63 = vst [vmem:[#allocation2 + $0x58] sm:$0xff] 0.0
      %64 = vst [vmem:[#allocation2 + $0x60] sm:$0xff] 0.0
      %65 = vst [vmem:[#allocation2 + $0x68] sm:$0xff] 0.0
      %66 = vst [vmem:[#allocation2 + $0x70] sm:$0xff] 0.0
      %67 = vst [vmem:[#allocation2 + $0x78] sm:$0xff] 0.0
    $region21: #{tpu_custom_call.1} parent=1 // pred_fallthru
      _
    %v68 = vld [vmem:[#allocation2] sm:$0xff]
    %v69 = vld [vmem:[#allocation2 + $0x8] sm:$0xff]
    %v70 = vld [vmem:[#allocation2 + $0x10] sm:$0xff]
    %v71 = vld [vmem:[#allocation2 + $0x18] sm:$0xff]
    %v72 = vld [vmem:[#allocation2 + $0x20] sm:$0xff]
    %v73 = vld [vmem:[#allocation2 + $0x28] sm:$0xff]
    %v74 = vld [vmem:[#allocation2 + $0x30] sm:$0xff]
    %v75 = vld [vmem:[#allocation2 + $0x38] sm:$0xff]
    %v76 = vld [vmem:[#allocation2 + $0x40] sm:$0xff]
    %v77 = vld [vmem:[#allocation2 + $0x48] sm:$0xff]
    %v78 = vld [vmem:[#allocation2 + $0x50] sm:$0xff]
    %v79 = vld [vmem:[#allocation2 + $0x58] sm:$0xff]
    %v80 = vld [vmem:[#allocation2 + $0x60] sm:$0xff]
    %v81 = vld [vmem:[#allocation2 + $0x68] sm:$0xff]
    %v82 = vld [vmem:[#allocation2 + $0x70] sm:$0xff]
    %v83 = vld [vmem:[#allocation2 + $0x78] sm:$0xff]
    %v84 = vld [vmem:[#allocation3] sm:$0xff]
    %v85 = vld [vmem:[#allocation3 + $0x8] sm:$0xff]
    %v86 = vld [vmem:[#allocation3 + $0x10] sm:$0xff]
    %v87 = vld [vmem:[#allocation3 + $0x18] sm:$0xff]
    %v88 = vld [vmem:[#allocation3 + $0x20] sm:$0xff]
    %v89 = vld [vmem:[#allocation3 + $0x28] sm:$0xff]
    %v90 = vld [vmem:[#allocation3 + $0x30] sm:$0xff]
    %v91 = vld [vmem:[#allocation3 + $0x38] sm:$0xff]
    %v92 = vld [vmem:[#allocation3 + $0x40] sm:$0xff]
    %v93 = vld [vmem:[#allocation3 + $0x48] sm:$0xff]
    %v94 = vld [vmem:[#allocation3 + $0x50] sm:$0xff]
    %v95 = vld [vmem:[#allocation3 + $0x58] sm:$0xff]
    %v96 = vld [vmem:[#allocation3 + $0x60] sm:$0xff]
    %v97 = vld [vmem:[#allocation3 + $0x68] sm:$0xff]
    %v98 = vld [vmem:[#allocation3 + $0x70] sm:$0xff]
    %v99 = vld [vmem:[#allocation3 + $0x78] sm:$0xff]
    %v100 = vld [vmem:[#allocation6] sm:$0xff]
    %v101 = vld [vmem:[#allocation6 + $0x8] sm:$0xff]
    %v102 = vld [vmem:[#allocation6 + $0x10] sm:$0xff]
    %v103 = vld [vmem:[#allocation6 + $0x18] sm:$0xff]
    %v104 = vld [vmem:[#allocation6 + $0x20] sm:$0xff]
    %v105 = vld [vmem:[#allocation6 + $0x28] sm:$0xff]
    %v106 = vld [vmem:[#allocation6 + $0x30] sm:$0xff]
    %v107 = vld [vmem:[#allocation6 + $0x38] sm:$0xff]
    %v108 = vld [vmem:[#allocation6 + $0x40] sm:$0xff]
    %v109 = vld [vmem:[#allocation6 + $0x48] sm:$0xff]
    %v110 = vld [vmem:[#allocation6 + $0x50] sm:$0xff]
    %v111 = vld [vmem:[#allocation6 + $0x58] sm:$0xff]
    %v112 = vld [vmem:[#allocation6 + $0x60] sm:$0xff]
    %v113 = vld [vmem:[#allocation6 + $0x68] sm:$0xff]
    %v114 = vld [vmem:[#allocation6 + $0x70] sm:$0xff]
    %v115 = vld [vmem:[#allocation6 + $0x78] sm:$0xff]
    %116 = vmatpush.msra.mxu0 %v115
    %117 = vmatpush.msra.mxu0 %v114
    %118 = vmatpush.msra.mxu0 %v113
    %119 = vmatpush.msra.mxu0 %v112
    %120 = vmatpush.msra.mxu0 %v111
    %121 = vmatpush.msra.mxu0 %v110
    %122 = vmatpush.msra.mxu0 %v109
    %123 = vmatpush.msra.mxu0 %v108
    %124 = vmatpush.msra.mxu0 %v107
    %125 = vmatpush.msra.mxu0 %v106
    %126 = vmatpush.msra.mxu0 %v105
    %127 = vmatpush.msra.mxu0 %v104
    %128 = vmatpush.msra.mxu0 %v103
    %129 = vmatpush.msra.mxu0 %v102
    %130 = vmatpush.msra.mxu0 %v101
    %131 = vmatpush.msra.mxu0 %v100
    %132 = vmatmul.f32.gmra.mxu0 %v84
    %v133 = vpop.f32.mrf.mxu0
    %v134 = vadd.f32 0.0, %v133
    %135 = vmatmul.f32.gmra.mxu0 %v85
    %v136 = vpop.f32.mrf.mxu0
    %v137 = vadd.f32 0.0, %v136
    %138 = vmatmul.f32.gmra.mxu0 %v86
    %v139 = vpop.f32.mrf.mxu0
    %v140 = vadd.f32 0.0, %v139
    %141 = vmatmul.f32.gmra.mxu0 %v87
    %v142 = vpop.f32.mrf.mxu0
    %v143 = vadd.f32 0.0, %v142
    %144 = vmatmul.f32.gmra.mxu0 %v88
    %v145 = vpop.f32.mrf.mxu0
    %v146 = vadd.f32 0.0, %v145
    %147 = vmatmul.f32.gmra.mxu0 %v89
    %v148 = vpop.f32.mrf.mxu0
    %v149 = vadd.f32 0.0, %v148
    %150 = vmatmul.f32.gmra.mxu0 %v90
    %v151 = vpop.f32.mrf.mxu0
    %v152 = vadd.f32 0.0, %v151
    %153 = vmatmul.f32.gmra.mxu0 %v91
    %v154 = vpop.f32.mrf.mxu0
    %v155 = vadd.f32 0.0, %v154
    %156 = vmatmul.f32.gmra.mxu0 %v92
    %v157 = vpop.f32.mrf.mxu0
    %v158 = vadd.f32 0.0, %v157
    %159 = vmatmul.f32.gmra.mxu0 %v93
    %v160 = vpop.f32.mrf.mxu0
    %v161 = vadd.f32 0.0, %v160
    %162 = vmatmul.f32.gmra.mxu0 %v94
    %v163 = vpop.f32.mrf.mxu0
    %v164 = vadd.f32 0.0, %v163
    %165 = vmatmul.f32.gmra.mxu0 %v95
    %v166 = vpop.f32.mrf.mxu0
    %v167 = vadd.f32 0.0, %v166
    %168 = vmatmul.f32.gmra.mxu0 %v96
    %v169 = vpop.f32.mrf.mxu0
    %v170 = vadd.f32 0.0, %v169
    %171 = vmatmul.f32.gmra.mxu0 %v97
    %v172 = vpop.f32.mrf.mxu0
    %v173 = vadd.f32 0.0, %v172
    %174 = vmatmul.f32.gmra.mxu0 %v98
    %v175 = vpop.f32.mrf.mxu0
    %v176 = vadd.f32 0.0, %v175
    %177 = vmatmul.f32.gmra.mxu0 %v99
    %v178 = vpop.f32.mrf.mxu0
    %v179 = vadd.f32 0.0, %v178
    %180 = vdwg.mxu0
    %v181 = vadd.f32 %v68, %v134
    %v182 = vadd.f32 %v69, %v137
    %v183 = vadd.f32 %v70, %v140
    %v184 = vadd.f32 %v71, %v143
    %v185 = vadd.f32 %v72, %v146
    %v186 = vadd.f32 %v73, %v149
    %v187 = vadd.f32 %v74, %v152
    %v188 = vadd.f32 %v75, %v155
    %v189 = vadd.f32 %v76, %v158
    %v190 = vadd.f32 %v77, %v161
    %v191 = vadd.f32 %v78, %v164
    %v192 = vadd.f32 %v79, %v167
    %v193 = vadd.f32 %v80, %v170
    %v194 = vadd.f32 %v81, %v173
    %v195 = vadd.f32 %v82, %v176
    %v196 = vadd.f32 %v83, %v179
    %197 = vst [vmem:[#allocation2] sm:$0xff] %v181
    %198 = vst [vmem:[#allocation2 + $0x8] sm:$0xff] %v182
    %199 = vst [vmem:[#allocation2 + $0x10] sm:$0xff] %v183
    %200 = vst [vmem:[#allocation2 + $0x18] sm:$0xff] %v184
    %201 = vst [vmem:[#allocation2 + $0x20] sm:$0xff] %v185
    %202 = vst [vmem:[#allocation2 + $0x28] sm:$0xff] %v186
    %203 = vst [vmem:[#allocation2 + $0x30] sm:$0xff] %v187
    %204 = vst [vmem:[#allocation2 + $0x38] sm:$0xff] %v188
    %205 = vst [vmem:[#allocation2 + $0x40] sm:$0xff] %v189
    %206 = vst [vmem:[#allocation2 + $0x48] sm:$0xff] %v190
    %207 = vst [vmem:[#allocation2 + $0x50] sm:$0xff] %v191
    %208 = vst [vmem:[#allocation2 + $0x58] sm:$0xff] %v192
    %209 = vst [vmem:[#allocation2 + $0x60] sm:$0xff] %v193
    %210 = vst [vmem:[#allocation2 + $0x68] sm:$0xff] %v194
    %211 = vst [vmem:[#allocation2 + $0x70] sm:$0xff] %v195
    %212 = vst [vmem:[#allocation2 + $0x78] sm:$0xff] %v196
    // Predicated region
    $region22: #{tpu_custom_call.1} parent=1 // pred_check
      %p213 = pneg %p48
    $region23: #{tpu_custom_call.1} parent=1 // pred_check_branch
      %215 = sbr.rel (%p213) target = $region25
    $region24: #{tpu_custom_call.1} parent=1 // pred_region
      %v216 = vld [vmem:[#allocation2] sm:$0xff]
      %v217 = vld [vmem:[#allocation2 + $0x8] sm:$0xff]
      %v218 = vld [vmem:[#allocation2 + $0x10] sm:$0xff]
      %v219 = vld [vmem:[#allocation2 + $0x18] sm:$0xff]
      %v220 = vld [vmem:[#allocation2 + $0x20] sm:$0xff]
      %v221 = vld [vmem:[#allocation2 + $0x28] sm:$0xff]
      %v222 = vld [vmem:[#allocation2 + $0x30] sm:$0xff]
      %v223 = vld [vmem:[#allocation2 + $0x38] sm:$0xff]
      %v224 = vld [vmem:[#allocation2 + $0x40] sm:$0xff]
      %v225 = vld [vmem:[#allocation2 + $0x48] sm:$0xff]
      %v226 = vld [vmem:[#allocation2 + $0x50] sm:$0xff]
      %v227 = vld [vmem:[#allocation2 + $0x58] sm:$0xff]
      %v228 = vld [vmem:[#allocation2 + $0x60] sm:$0xff]
      %v229 = vld [vmem:[#allocation2 + $0x68] sm:$0xff]
      %v230 = vld [vmem:[#allocation2 + $0x70] sm:$0xff]
      %v231 = vld [vmem:[#allocation2 + $0x78] sm:$0xff]
      %232 = vst [vmem:[#allocation8] sm:$0xff] %v216
      %233 = vst [vmem:[#allocation8 + $0x8] sm:$0xff] %v217
      %234 = vst [vmem:[#allocation8 + $0x10] sm:$0xff] %v218
      %235 = vst [vmem:[#allocation8 + $0x18] sm:$0xff] %v219
      %236 = vst [vmem:[#allocation8 + $0x20] sm:$0xff] %v220
      %237 = vst [vmem:[#allocation8 + $0x28] sm:$0xff] %v221
      %238 = vst [vmem:[#allocation8 + $0x30] sm:$0xff] %v222
      %239 = vst [vmem:[#allocation8 + $0x38] sm:$0xff] %v223
      %240 = vst [vmem:[#allocation8 + $0x40] sm:$0xff] %v224
      %241 = vst [vmem:[#allocation8 + $0x48] sm:$0xff] %v225
      %242 = vst [vmem:[#allocation8 + $0x50] sm:$0xff] %v226
      %243 = vst [vmem:[#allocation8 + $0x58] sm:$0xff] %v227
      %244 = vst [vmem:[#allocation8 + $0x60] sm:$0xff] %v228
      %245 = vst [vmem:[#allocation8 + $0x68] sm:$0xff] %v229
      %246 = vst [vmem:[#allocation8 + $0x70] sm:$0xff] %v230
      %247 = vst [vmem:[#allocation8 + $0x78] sm:$0xff] %v231
      %v248 = vadd.f32 %v216, %v217
      %v249 = vadd.f32 %v248, %v218
      %v250 = vadd.f32 %v249, %v219
      %v251 = vadd.f32 %v250, %v220
      %v252 = vadd.f32 %v251, %v221
      %v253 = vadd.f32 %v252, %v222
      %v254 = vadd.f32 %v253, %v223
      %v255 = vadd.f32 %v254, %v224
      %v256 = vadd.f32 %v255, %v225
      %v257 = vadd.f32 %v256, %v226
      %v258 = vadd.f32 %v257, %v227
      %v259 = vadd.f32 %v258, %v228
      %v260 = vadd.f32 %v259, %v229
      %v261 = vadd.f32 %v260, %v230
      %v262 = vadd.f32 %v261, %v231
      %v263 = vrot.slane %v262, 4
      %v264 = vadd.f32 %v262, %v263
      %v265 = vrot.slane %v264, 2
      %v266 = vadd.f32 %v264, %v265
      %v267 = vrot.slane %v266, 1
      %v268 = vadd.f32 %v266, %v267
      %269 = vst [vmem:[#allocation9] sm:$0x1] %v268
      %v270 = vmul.f32 %v216, %v216
      %v271 = vmul.f32 %v217, %v217
      %v272 = vmul.f32 %v218, %v218
      %v273 = vmul.f32 %v219, %v219
      %v274 = vmul.f32 %v220, %v220
      %v275 = vmul.f32 %v221, %v221
      %v276 = vmul.f32 %v222, %v222
      %v277 = vmul.f32 %v223, %v223
      %v278 = vmul.f32 %v224, %v224
      %v279 = vmul.f32 %v225, %v225
      %v280 = vmul.f32 %v226, %v226
      %v281 = vmul.f32 %v227, %v227
      %v282 = vmul.f32 %v228, %v228
      %v283 = vmul.f32 %v229, %v229
      %v284 = vmul.f32 %v230, %v230
      %v285 = vmul.f32 %v231, %v231
      %v286 = vadd.f32 %v270, %v271
      %v287 = vadd.f32 %v286, %v272
      %v288 = vadd.f32 %v287, %v273
      %v289 = vadd.f32 %v288, %v274
      %v290 = vadd.f32 %v289, %v275
      %v291 = vadd.f32 %v290, %v276
      %v292 = vadd.f32 %v291, %v277
      %v293 = vadd.f32 %v292, %v278
      %v294 = vadd.f32 %v293, %v279
      %v295 = vadd.f32 %v294, %v280
      %v296 = vadd.f32 %v295, %v281
      %v297 = vadd.f32 %v296, %v282
      %v298 = vadd.f32 %v297, %v283
      %v299 = vadd.f32 %v298, %v284
      %v300 = vadd.f32 %v299, %v285
      %v301 = vrot.slane %v300, 4
      %v302 = vadd.f32 %v300, %v301
      %v303 = vrot.slane %v302, 2
      %v304 = vadd.f32 %v302, %v303
      %v305 = vrot.slane %v304, 1
      %v306 = vadd.f32 %v304, %v305
      %307 = vst [vmem:[#allocation11] sm:$0x1] %v306
    $region25: #{tpu_custom_call.1} parent=1 // pred_fallthru
      _
    // Predicated region
    $region26: #{tpu_custom_call.1} parent=1 // pred_check
      _
    $region27: #{tpu_custom_call.1} parent=1 // pred_check_branch
      %309 = sbr.rel (0) target = $region29
    $region28: #{tpu_custom_call.1} parent=1 // pred_region
      %311 = vsyncadd [#allocation5], 0
      %s312 = sshll.u32 [#allocation8], 4
      %s313 = int_to_ptr.vmem [resolvable:$true] %s312
      %s314 = sshll.u32 %s2, 4
      %s315 = int_to_ptr.hbm [resolvable:$true] %s314
      %320 = dma.vmem_to_hbm [thread:$0]  %s313, 2048, %s315, [#allocation5], 128, 128, 8
    $region29: #{tpu_custom_call.1} parent=1 // pred_fallthru
      _
    // Predicated region
    $region30: #{tpu_custom_call.1} parent=1 // pred_check
      _
    $region31: #{tpu_custom_call.1} parent=1 // pred_check_branch
      %322 = sbr.rel (0) target = $region33
    $region32: #{tpu_custom_call.1} parent=1 // pred_region
      %324 = vsyncadd [#allocation10], 0
      %s326 = sshll.u32 [#allocation9], 4
      %s327 = int_to_ptr.vmem [resolvable:$true] %s326
      %s328 = sshll.u32 %s3, 4
      %s329 = int_to_ptr.hbm [resolvable:$true] %s328
      %331 = dma.vmem_to_hbm [thread:$0]  %s327, 16, %s329, [#allocation10]
    $region33: #{tpu_custom_call.1} parent=1 // pred_fallthru
      _
    // Predicated region
    $region34: #{tpu_custom_call.1} parent=1 // pred_check
      _
    $region35: #{tpu_custom_call.1} parent=1 // pred_check_branch
      %333 = sbr.rel (0) target = $region37
    $region36: #{tpu_custom_call.1} parent=1 // pred_region
      %335 = vsyncadd [#allocation10], 0
      %s337 = sshll.u32 [#allocation11], 4
      %s338 = int_to_ptr.vmem [resolvable:$true] %s337
      %s339 = sshll.u32 %s4, 4
      %s340 = int_to_ptr.hbm [resolvable:$true] %s339
      %342 = dma.vmem_to_hbm [thread:$0]  %s338, 16, %s340, [#allocation10]
    $region37: #{tpu_custom_call.1} parent=1 // pred_fallthru
      _
    // Predicated region
    $region38: #{tpu_custom_call.1} parent=1 // pred_check
      _
    $region39: #{tpu_custom_call.1} parent=1 // pred_check_branch
      %344 = sbr.rel (0) target = $region41
    $region40: #{tpu_custom_call.1} parent=1 // pred_region
      %346 = dma.done [#allocation5], 2048
    $region41: #{tpu_custom_call.1} parent=1 // pred_fallthru
      _
    // Predicated region
    $region42: #{tpu_custom_call.1} parent=1 // pred_check
      _
    $region43: #{tpu_custom_call.1} parent=1 // pred_check_branch
      %348 = sbr.rel (0) target = $region45
    $region44: #{tpu_custom_call.1} parent=1 // pred_region
      %350 = dma.done [#allocation10], 16
    $region45: #{tpu_custom_call.1} parent=1 // pred_fallthru
      _
    // Predicated region
    $region46: #{tpu_custom_call.1} parent=1 // pred_check
      _
    $region47: #{tpu_custom_call.1} parent=1 // pred_check_branch
      %352 = sbr.rel (0) target = $region49
    $region48: #{tpu_custom_call.1} parent=1 // pred_region
      %354 = dma.done [#allocation10], 16
    $region49: #{tpu_custom_call.1} parent=1 // pred_fallthru
      _
    %355 = vsyncpa [#allocation4], 1
    %356 = vsyncpa [#allocation7], 1
    %357 = vsyncpa [#allocation5], 1
    %358 = vsyncpa [#allocation10], 1

</llo_original>
